<compile_context>
chip_gen: v6e
topology: v6e:2x2x1
jax: 0.10.0
libtpu: 0.0.40
codegen_flags: <defaults>
</compile_context>

<pallas_src>
import functools
import math

import jax
import jax.numpy as jnp
from jax.experimental import pallas as pl
from jax.experimental.pallas import tpu as pltpu


def _attn_head_kernel(x_ref, w_ref, b_ref, o_ref, *, seg, dim_v, mxu_dtype):
    """One batch element per grid step.

    x_ref: (1, T, 3C)   lane-concatenated [Q | K | V] activations
    w_ref: (3C, 3*seg)  fused block-diagonal projection weight (128-aligned segments)
    b_ref: (1, 3*seg)   fused bias (q segment pre-scaled by 1/sqrt(dim_k))
    o_ref: (1, T, dim_v)
    """
    x = x_ref[0]                                                    # (T, 3C)

    # One MXU GEMM for all three projections; softmax scale already folded into q block.
    proj = jnp.dot(x.astype(mxu_dtype), w_ref[...].astype(mxu_dtype),
                   preferred_element_type=jnp.float32) + b_ref[...]  # (T, 3*seg) f32

    # 128-lane-aligned segment views (free).  Lanes beyond dim_k / dim_v are exactly 0.
    pq = proj[:, 0:seg]
    pk = proj[:, seg:2 * seg]
    pv = proj[:, 2 * seg:2 * seg + dim_v]

    # Scores = (scaled pq) @ pk^T, contracted over the full 128-lane segment
    # (zero padding lanes contribute nothing -> exact).  dot_general on the shared
    # last dim: no explicit XLU transpose of pk is emitted.
    scores = jax.lax.dot_general(
        pq.astype(mxu_dtype), pk.astype(mxu_dtype),
        dimension_numbers=(((1,), (1,)), ((), ())),
        preferred_element_type=jnp.float32)                          # (T, T)

    # Causal (lower-triangular) mask from a single per-tile iota pair.
    T = scores.shape[0]
    row = jax.lax.broadcasted_iota(jnp.int32, (T, T), 0)
    col = jax.lax.broadcasted_iota(jnp.int32, (T, T), 1)
    scores = jnp.where(col <= row, scores, -1e30)   # large finite negative: NaN-safe

    # Numerically stable softmax; reciprocal lowers to the (otherwise idle) EUP slot.
    m = jnp.max(scores, axis=-1, keepdims=True)
    e = jnp.exp(scores - m)
    denom = jnp.sum(e, axis=-1, keepdims=True)
    weights = e * pl.reciprocal(denom, approx=True)
    # TODO(synk): training-mode dropout would mask `weights` here.

    out = jnp.dot(weights.astype(mxu_dtype), pv.astype(mxu_dtype),
                  preferred_element_type=jnp.float32)                # (T, dim_v)
    o_ref[0] = out.astype(o_ref.dtype)


def make_fused_params(params):
    """Build the fused block-diagonal projection weight/bias ONCE (hoisted out of the
    per-call path).  Layout: x = [Q | K | V] (3C wide)  ->  proj = [pq | pk | pv], each
    segment `seg` lanes wide (128-aligned); 1/sqrt(dim_k) folded into the q block."""
    wq, bq = params["wq"], params["bq"]
    wk, bk = params["wk"], params["bk"]
    wv, bv = params["wv"], params["bv"]
    C, dim_k = wq.shape
    dim_v = wv.shape[1]
    seg = max(128, ((max(dim_k, dim_v) + 127) // 128) * 128)
    scale = 1.0 / math.sqrt(dim_k)

    w_f = jnp.zeros((3 * C, 3 * seg), jnp.float32)
    w_f = w_f.at[0:C, 0:dim_k].set(wq * scale)
    w_f = w_f.at[C:2 * C, seg:seg + dim_k].set(wk)
    w_f = w_f.at[2 * C:3 * C, 2 * seg:2 * seg + dim_v].set(wv)

    b_f = jnp.zeros((1, 3 * seg), jnp.float32)
    b_f = b_f.at[0, 0:dim_k].set(bq[0] * scale)
    b_f = b_f.at[0, seg:seg + dim_k].set(bk[0])
    b_f = b_f.at[0, 2 * seg:2 * seg + dim_v].set(bv[0])
    return w_f, b_f, seg, dim_v


@functools.partial(jax.jit, static_argnames=("seg", "dim_v", "mxu_dtype"))
def self_attention_head(Q, K, V, w_f, b_f, *, seg, dim_v, mxu_dtype=jnp.float32):
    B, T, C = Q.shape
    d_proj = 3 * seg

    # Single lane-concat in the wrapper -> the kernel sees one activation stream.
    x = jnp.concatenate([Q, K, V], axis=-1)                          # (B, T, 3C)

    kernel = functools.partial(_attn_head_kernel, seg=seg, dim_v=dim_v,
                               mxu_dtype=mxu_dtype)

    cost = pl.CostEstimate(
        flops=B * (2 * T * (3 * C) * d_proj + 2 * T * seg * T + 2 * T * T * dim_v),
        transcendentals=B * T * T,
        bytes_accessed=4 * (B * T * 3 * C + 3 * C * d_proj + d_proj + B * T * dim_v))

    return pl.pallas_call(
        kernel,
        out_shape=jax.ShapeDtypeStruct((B, T, dim_v), jnp.float32),
        grid=(B,),
        in_specs=[
            pl.BlockSpec((1, T, 3 * C), lambda b: (b, 0, 0)),
            pl.BlockSpec((3 * C, d_proj), lambda b: (0, 0)),   # resident across grid
            pl.BlockSpec((1, d_proj), lambda b: (0, 0)),       # resident across grid
        ],
        out_specs=pl.BlockSpec((1, T, dim_v), lambda b: (b, 0, 0)),
        compiler_params=pltpu.CompilerParams(dimension_semantics=("parallel",)),
        cost_estimate=cost,
    )(x, w_f, b_f)


def _reference(Q, K, V, p):
    # Pure-JAX reference mirroring the PyTorch forward (eval mode).
    pq = Q @ p["wq"] + p["bq"]
    pk = K @ p["wk"] + p["bk"]
    pv = V @ p["wv"] + p["bv"]
    dim_k = p["wq"].shape[1]
    w = pq @ jnp.swapaxes(pk, -2, -1) / math.sqrt(dim_k)
    T = Q.shape[1]
    tril = jnp.tril(jnp.ones((T, T)))
    w = jnp.where(tril == 0, -jnp.inf, w)
    w = jax.nn.softmax(w, axis=-1)
    return w @ pv


if __name__ == "__main__":
    # Hyperparameters implied by the module.
    B, T = 2, 8
    model_dim = 32
    dim_k = 16
    dim_v = 16
    context_length = 8  # == T here

    key = jax.random.PRNGKey(0)
    kq, kk, kv, kbq, kbk, kbv, kQ, kK, kV = jax.random.split(key, 9)

    # Deterministic "Linear" parameters.  PyTorch weight is (out, in); we store the
    # transpose (in, out) so the kernel computes x @ W + b.
    init = 1.0 / math.sqrt(model_dim)
    params = {
        "wq": jax.random.uniform(kq, (model_dim, dim_k), jnp.float32, -init, init),
        "wk": jax.random.uniform(kk, (model_dim, dim_k), jnp.float32, -init, init),
        "wv": jax.random.uniform(kv, (model_dim, dim_v), jnp.float32, -init, init),
        "bq": jax.random.uniform(kbq, (1, dim_k), jnp.float32, -init, init),
        "bk": jax.random.uniform(kbk, (1, dim_k), jnp.float32, -init, init),
        "bv": jax.random.uniform(kbv, (1, dim_v), jnp.float32, -init, init),
    }

    Q = jax.random.normal(kQ, (B, T, model_dim), jnp.float32)
    K = jax.random.normal(kK, (B, T, model_dim), jnp.float32)
    V = jax.random.normal(kV, (B, T, model_dim), jnp.float32)

    # Fused weight/bias built once (hoisted out of the per-call path).
    w_f, b_f, seg, dv = make_fused_params(params)

    ref = _reference(Q, K, V, params)

    # f32 MXU path: exact parity with the PyTorch module (tolerance covers the EUP
    # approximate reciprocal in the softmax normalization).
    out = self_attention_head(Q, K, V, w_f, b_f, seg=seg, dim_v=dv,
                              mxu_dtype=jnp.float32)
    out = jax.block_until_ready(out)
    assert out.shape == (B, T, dim_v)
    assert jnp.allclose(out, ref, atol=2e-3, rtol=2e-3), "f32 mismatch vs reference"

    # bf16 MXU-operand path (v6e/v7x fast path; f32 accumulation, f32 softmax).
    out_bf16 = self_attention_head(Q, K, V, w_f, b_f, seg=seg, dim_v=dv,
                                   mxu_dtype=jnp.bfloat16)
    out_bf16 = jax.block_until_ready(out_bf16)
    assert jnp.allclose(out_bf16, ref, atol=5e-2, rtol=5e-2), "bf16 mismatch vs reference"

    print("KERNEL_OK")
</pallas_src>

<mosaic_0001>
module attributes {stable_mosaic.version = 11 : i64} {
  func.func @_attn_head_kernel(%arg0: i32, %arg1: memref<1x8x96xf32, #tpu.memory_space<vmem>>, %arg2: memref<96x384xf32, #tpu.memory_space<vmem>>, %arg3: memref<1x384xf32, #tpu.memory_space<vmem>>, %arg4: memref<1x8x16xf32, #tpu.memory_space<vmem>>) attributes {dimension_semantics = [#tpu.dimension_semantics<parallel>], iteration_bounds = array<i64: 2>, scalar_prefetch = 0 : i64, scratch_operands = 0 : i64, tpu.core_type = #tpu.core_type<tc>, window_params = [{transform_indices = @transform_0, window_bounds = array<i64: 1, 8, 96>}, {pipeline_mode = #tpu.pipeline_mode<synchronous>, transform_indices = @transform_1, window_bounds = array<i64: 96, 384>}, {pipeline_mode = #tpu.pipeline_mode<synchronous>, transform_indices = @transform_2, window_bounds = array<i64: 1, 384>}, {transform_indices = @transform_3, window_bounds = array<i64: 1, 8, 16>}]} {
    %c0 = arith.constant 0 : index
    %c0_0 = arith.constant 0 : index
    %c0_1 = arith.constant 0 : index
    %0 = vector.load %arg1[%c0, %c0_0, %c0_1] : memref<1x8x96xf32, #tpu.memory_space<vmem>>, vector<1x8x96xf32>
    %1 = vector.shape_cast %0 : vector<1x8x96xf32> to vector<8x96xf32>
    %c0_2 = arith.constant 0 : index
    %c0_3 = arith.constant 0 : index
    %2 = vector.load %arg2[%c0_2, %c0_3] : memref<96x384xf32, #tpu.memory_space<vmem>>, vector<96x384xf32>
    %cst = arith.constant dense<0.000000e+00> : vector<8x384xf32>
    %3 = tpu.matmul %1, %2, %cst {dimension_numbers = #tpu.dot_dimension_numbers<[1], [0], [0], [1], [0, 0, 1, 1], [], []>} : vector<8x96xf32>, vector<96x384xf32>, vector<8x384xf32> -> vector<8x384xf32>
    %c0_4 = arith.constant 0 : index
    %c0_5 = arith.constant 0 : index
    %4 = vector.load %arg3[%c0_4, %c0_5] : memref<1x384xf32, #tpu.memory_space<vmem>>, vector<1x384xf32>
    %5 = vector.broadcast %4 : vector<1x384xf32> to vector<8x384xf32>
    %6 = arith.addf %3, %5 : vector<8x384xf32>
    %7 = vector.extract_strided_slice %6 {offsets = [0, 0], sizes = [8, 128], strides = [1, 1]} : vector<8x384xf32> to vector<8x128xf32>
    %8 = vector.extract_strided_slice %6 {offsets = [0, 128], sizes = [8, 128], strides = [1, 1]} : vector<8x384xf32> to vector<8x128xf32>
    %9 = vector.extract_strided_slice %6 {offsets = [0, 256], sizes = [8, 16], strides = [1, 1]} : vector<8x384xf32> to vector<8x16xf32>
    %cst_6 = arith.constant dense<0.000000e+00> : vector<8x8xf32>
    %10 = tpu.matmul %7, %8, %cst_6 {dimension_numbers = #tpu.dot_dimension_numbers<[1], [1], [0], [0], [0, 0, 1, 0], [], []>} : vector<8x128xf32>, vector<8x128xf32>, vector<8x8xf32> -> vector<8x8xf32>
    %11 = tpu.iota {dimensions = array<i32: 0>} : vector<8x8xi32>
    %12 = tpu.iota {dimensions = array<i32: 1>} : vector<8x8xi32>
    %13 = arith.cmpi sle, %12, %11 : vector<8x8xi32>
    %cst_7 = arith.constant -1.000000e+30 : f32
    %14 = vector.broadcast %cst_7 : f32 to vector<8x8xf32>
    %15 = arith.select %13, %10, %14 : vector<8x8xi1>, vector<8x8xf32>
    %cst_8 = arith.constant dense<0xFF800000> : vector<8xf32>
    %16 = vector.multi_reduction <maximumf>, %15, %cst_8 [1] : vector<8x8xf32> to vector<8xf32>
    %17 = vector.shape_cast %16 : vector<8xf32> to vector<8x1xf32>
    %18 = vector.broadcast %17 : vector<8x1xf32> to vector<8x8xf32>
    %19 = arith.subf %15, %18 : vector<8x8xf32>
    %20 = math.exp %19 : vector<8x8xf32>
    %cst_9 = arith.constant dense<0.000000e+00> : vector<8xf32>
    %21 = vector.multi_reduction <add>, %20, %cst_9 [1] : vector<8x8xf32> to vector<8xf32>
    %22 = vector.shape_cast %21 : vector<8xf32> to vector<8x1xf32>
    %23 = tpu.reciprocal %22 {approx = true} : vector<8x1xf32> -> vector<8x1xf32>
    %24 = vector.broadcast %23 : vector<8x1xf32> to vector<8x8xf32>
    %25 = arith.mulf %20, %24 : vector<8x8xf32>
    %cst_10 = arith.constant dense<0.000000e+00> : vector<8x16xf32>
    %26 = tpu.matmul %25, %9, %cst_10 {dimension_numbers = #tpu.dot_dimension_numbers<[1], [0], [0], [1], [0, 0, 1, 1], [], []>} : vector<8x8xf32>, vector<8x16xf32>, vector<8x16xf32> -> vector<8x16xf32>
    %c0_11 = arith.constant 0 : index
    %c0_12 = arith.constant 0 : index
    %c0_13 = arith.constant 0 : index
    %27 = vector.load %arg4[%c0_11, %c0_12, %c0_13] : memref<1x8x16xf32, #tpu.memory_space<vmem>>, vector<1x8x16xf32>
    %28 = vector.shape_cast %27 : vector<1x8x16xf32> to vector<8x16xf32>
    %29 = vector.shape_cast %26 : vector<8x16xf32> to vector<1x8x16xf32>
    tpu.vector_store %arg4[%c0_11, %c0_12, %c0_13], %29 {strides = array<i32>} : memref<1x8x16xf32, #tpu.memory_space<vmem>>, vector<1x8x16xf32>,
    return
  }
  func.func @transform_0(%arg0: i32) -> (i32, i32, i32) {
    %c0_i32 = arith.constant 0 : i32
    %c0_i32_0 = arith.constant 0 : i32
    %c0_i32_1 = arith.constant 0 : i32
    return %arg0, %c0_i32, %c0_i32_0 : i32, i32, i32
  }
  func.func @transform_1(%arg0: i32) -> (i32, i32) {
    %c0_i32 = arith.constant 0 : i32
    %c0_i32_0 = arith.constant 0 : i32
    %c0_i32_1 = arith.constant 0 : i32
    return %c0_i32, %c0_i32_0 : i32, i32
  }
  func.func @transform_2(%arg0: i32) -> (i32, i32) {
    %c0_i32 = arith.constant 0 : i32
    %c0_i32_0 = arith.constant 0 : i32
    %c0_i32_1 = arith.constant 0 : i32
    return %c0_i32, %c0_i32_0 : i32, i32
  }
  func.func @transform_3(%arg0: i32) -> (i32, i32, i32) {
    %c0_i32 = arith.constant 0 : i32
    %c0_i32_0 = arith.constant 0 : i32
    %c0_i32_1 = arith.constant 0 : i32
    return %arg0, %c0_i32, %c0_i32_0 : i32, i32, i32
  }
}

</mosaic_0001>

<llo_original>
// kernel: self_attention_head.1
$region0: #{self_attention_head.1}
  #allocation0 [shape = 'u32[]', space=smem, size = 0x4, offset = 0x4, fixed_abs, tag = 'smem constant byte address 0x4 - core index']
  #allocation1 [shape = 'u32[144,128]{1,0:T(1,128)}', space=vmem, size = 0x12000, scoped, tag = 'internal scratch']
  %s0 = inlined_call_operand.vmem [shape: f32[2,8,96], index: 0, kind: input, shape index: {}]
  %s1 = inlined_call_operand.hbm [shape: f32[96,384], index: 1, kind: input, shape index: {}]
  %s2 = inlined_call_operand.vmem [shape: f32[1,384], index: 2, kind: input, shape index: {}]
  %s3 = inlined_call_operand.hbm [shape: f32[2,8,16], index: 3, kind: output, shape index: {}]
  %s4 = sld [smem:[#allocation0]]
  $region49: #{self_attention_head.1} parent=0
    _
  %s6 = ssub.s32 1, %s4
  %s7 = scalar_select 0, %s6, %s4
  $region1: #{self_attention_head.1} parent=0
    #allocation2 [shape = 'u8[147456]{0}', space=vmem, size = 0x24000, scoped, tag = 'input window, operand 1, single buffered']
    #allocation3 [shape = 's32[2]{0}', space=sflag, size = 0x8, scoped, tag = 'scoped memory for self_attention_head.1']
    #allocation4 [shape = 's32[2]{0}', space=sflag, size = 0x8, scoped, tag = 'scoped memory for self_attention_head.1']
    #allocation5 [shape = 'u8[8192]{0}', space=vmem, size = 0x2000, scoped, tag = 'output window, operand 0']
    %8 = vsyncpa [#allocation3], 0
    %9 = vsyncpa [#allocation4], 0
    %s10 = scalar_lea.sflag [#allocation4], 1
    %11 = vsyncpa %s10, 0
    loop: start=0, step=1, limit=4
    $region2: #{self_attention_head.1} parent=1 // loop_pre_header
      _
    $region3: #{self_attention_head.1} parent=1 // loop_header
      %s13 = sphi 0, %s17
      %p14 = scmp.ge.s32.totalorder %s13, 4
      %s23 = sphi 0, %s25
      %s26 = sphi 0, %s23
      %s27 = sphi 0, %s26
      %s43 = sphi 0, %s27
      %s47 = sphi 0, %s47
      %s49 = sphi 0, %s47
      %s50 = sphi 0, %s49
      %s64 = sphi 0, %s50
      %s68 = sphi 0, %s68
      %s70 = sphi 0, %s68
      %s71 = sphi 0, %s70
      %s85 = sphi 0, %s71
      %s91 = sphi 0, %s93
      %s94 = sphi 0, %s91
      %s95 = sphi 0, %s94
      %s111 = sphi 0, %s95
    $region4: #{self_attention_head.1} parent=1 // loop_header_branch
      %16 = sbr.rel (%p14) target = $region8
    $region5: #{self_attention_head.1} parent=1 // loop_body
      %s18 = ssub.s32 %s13, 1
      %s19 = ssub.s32 %s13, 2
      %s20 = sadd.s32 %s13, 1
      %s21 = ssub.s32 %s13, %s20
      %p22 = scmp.eq.s32.totalorder %s21, 0
      %s24 = sadd.s32 %s23, 1
      %s25 = scalar_select %p22, %s23, %s24
      %p28 = pneg %p22
      %p29 = scmp.eq.s32.totalorder %s13, 1
      %p30 = por %p28, %p29
      %p31 = scmp.ne.s32.totalorder %s23, %s26
      %p32 = scmp.eq.s32.totalorder %s13, 0
      %p33 = por %p31, %p32
      %p34 = scmp.ne.s32.totalorder %s23, %s26
      %p35 = scmp.eq.s32.totalorder %s18, 1
      %p36 = por %p34, %p35
      %p37 = scmp.ne.s32.totalorder %s26, %s27
      %p38 = scmp.eq.s32.totalorder %s18, 0
      %p39 = por %p37, %p38
      %p40 = scmp.ne.s32.totalorder %s26, %s27
      %p41 = scmp.eq.s32.totalorder %s19, 1
      %p42 = por %p40, %p41
      %p44 = scmp.ne.s32.totalorder %s27, %s43
      %p45 = scmp.eq.s32.totalorder %s19, 0
      %p46 = por %p44, %p45
      %s48 = sadd.s32 %s47, 1
      %p51 = scmp.eq.s32.totalorder %s13, 1
      %p52 = scmp.ne.s32.totalorder %s47, %s49
      %p53 = scmp.eq.s32.totalorder %s13, 0
      %p54 = por %p52, %p53
      %p55 = scmp.ne.s32.totalorder %s47, %s49
      %p56 = scmp.eq.s32.totalorder %s18, 1
      %p57 = por %p55, %p56
      %p58 = scmp.ne.s32.totalorder %s49, %s50
      %p59 = scmp.eq.s32.totalorder %s18, 0
      %p60 = por %p58, %p59
      %p61 = scmp.ne.s32.totalorder %s49, %s50
      %p62 = scmp.eq.s32.totalorder %s19, 1
      %p63 = por %p61, %p62
      %p65 = scmp.ne.s32.totalorder %s50, %s64
      %p66 = scmp.eq.s32.totalorder %s19, 0
      %p67 = por %p65, %p66
      %s69 = sadd.s32 %s68, 1
      %p72 = scmp.eq.s32.totalorder %s13, 1
      %p73 = scmp.ne.s32.totalorder %s68, %s70
      %p74 = scmp.eq.s32.totalorder %s13, 0
      %p75 = por %p73, %p74
      %p76 = scmp.ne.s32.totalorder %s68, %s70
      %p77 = scmp.eq.s32.totalorder %s18, 1
      %p78 = por %p76, %p77
      %p79 = scmp.ne.s32.totalorder %s70, %s71
      %p80 = scmp.eq.s32.totalorder %s18, 0
      %p81 = por %p79, %p80
      %p82 = scmp.ne.s32.totalorder %s70, %s71
      %p83 = scmp.eq.s32.totalorder %s19, 1
      %p84 = por %p82, %p83
      %p86 = scmp.ne.s32.totalorder %s71, %s85
      %p87 = scmp.eq.s32.totalorder %s19, 0
      %p88 = por %p86, %p87
      %s89 = ssub.s32 %s13, %s20
      %p90 = scmp.eq.s32.totalorder %s89, 0
      %s92 = sadd.s32 %s91, 1
      %s93 = scalar_select %p90, %s91, %s92
      %p96 = pneg %p90
      %p97 = scmp.eq.s32.totalorder %s13, 1
      %p98 = por %p96, %p97
      %p99 = scmp.ne.s32.totalorder %s91, %s94
      %p100 = scmp.eq.s32.totalorder %s13, 0
      %p101 = por %p99, %p100
      %p102 = scmp.ne.s32.totalorder %s91, %s94
      %p103 = scmp.eq.s32.totalorder %s18, 1
      %p104 = por %p102, %p103
      %p105 = scmp.ne.s32.totalorder %s94, %s95
      %p106 = scmp.eq.s32.totalorder %s18, 0
      %p107 = por %p105, %p106
      %p108 = scmp.ne.s32.totalorder %s94, %s95
      %p109 = scmp.eq.s32.totalorder %s19, 1
      %p110 = por %p108, %p109
      %p112 = scmp.ne.s32.totalorder %s95, %s111
      %p113 = scmp.eq.s32.totalorder %s19, 0
      %p114 = por %p112, %p113
      %p115 = scmp.le.s32.totalorder 1, %s13
      %p116 = scmp.lt.s32.totalorder %s13, 3
      %p117 = pnand %p115, %p116
      %p118 = pneg %p117
      // Predicated region
      $region9: #{self_attention_head.1} parent=5 // pred_check
        _
      $region10: #{self_attention_head.1} parent=5 // pred_check_branch
        %120 = sbr.rel (%p117) target = $region12
      $region11: #{self_attention_head.1} parent=5 // pred_region
        %s121 = ssub.s32 %s13, 1
        // Predicated region
        $region13: #{self_attention_head.1} parent=11 // pred_check
          %p122 = pneg %p60
        $region14: #{self_attention_head.1} parent=11 // pred_check_branch
          %124 = sbr.rel (%p122) target = $region16
        $region15: #{self_attention_head.1} parent=11 // pred_region
          %s126 = ssub.s32 4608, 4608
          %127 = vsyncadd [#allocation3], %s126
          %s128 = sshll.u32 [#allocation2], 4
          %s129 = int_to_ptr.vmem [resolvable:$true] %s128
          %134 = dma.hbm_to_vmem [thread:$0]  %s1, 4608, %s129, [#allocation3], 384, 384, 24
        $region16: #{self_attention_head.1} parent=11 // pred_fallthru
          _
        // Predicated region
        $region17: #{self_attention_head.1} parent=11 // pred_check
          %p135 = pneg %p81
        $region18: #{self_attention_head.1} parent=11 // pred_check_branch
          %137 = sbr.rel (%p135) target = $region20
        $region19: #{self_attention_head.1} parent=11 // pred_region
          _
        $region20: #{self_attention_head.1} parent=11 // pred_fallthru
          _
      $region12: #{self_attention_head.1} parent=5 // pred_fallthru
        _
      %p138 = scmp.lt.s32.totalorder %s13, 2
      // Predicated region
      $region21: #{self_attention_head.1} parent=5 // pred_check
        %p139 = pneg %p138
      $region22: #{self_attention_head.1} parent=5 // pred_check_branch
        %141 = sbr.rel (%p139) target = $region24
      $region23: #{self_attention_head.1} parent=5 // pred_region
        // Predicated region
        $region25: #{self_attention_head.1} parent=23 // pred_check
          %p142 = pneg %p33
        $region26: #{self_attention_head.1} parent=23 // pred_check_branch
          %144 = sbr.rel (%p142) target = $region28
        $region27: #{self_attention_head.1} parent=23 // pred_region
          %p145 = scmp.lt.s32.totalorder %s13, 1
          %s146 = scalar_select %p145, %s13, 1
          %s147 = smul.addr %s146, 8
          %s148 = scalar_lea.vmem %s0, %s147
        $region28: #{self_attention_head.1} parent=23 // pred_fallthru
          _
      $region24: #{self_attention_head.1} parent=5 // pred_fallthru
        _
      %p149 = scmp.le.s32.totalorder 1, %s13
      %p150 = scmp.lt.s32.totalorder %s13, 3
      %p151 = pnand %p149, %p150
      %p152 = pneg %p151
      // Predicated region
      $region29: #{self_attention_head.1} parent=5 // pred_check
        _
      $region30: #{self_attention_head.1} parent=5 // pred_check_branch
        %154 = sbr.rel (%p151) target = $region32
      $region31: #{self_attention_head.1} parent=5 // pred_region
        %s155 = ssub.s32 %s13, 1
        // Predicated region
        $region33: #{self_attention_head.1} parent=31 // pred_check
          %p156 = pneg %p60
        $region34: #{self_attention_head.1} parent=31 // pred_check_branch
          %158 = sbr.rel (%p156) target = $region36
        $region35: #{self_attention_head.1} parent=31 // pred_region
          %159 = dma.done [#allocation3], 4608
        $region36: #{self_attention_head.1} parent=31 // pred_fallthru
          _
        %p160 = scmp.lt.s32.totalorder %s18, 1
        %s161 = scalar_select %p160, %s18, 1
        %s162 = smul.addr %s161, 8
        %s163 = scalar_lea.vmem %s0, %s162
        %p164 = pneg %p39
        %p165 = pneg %p36
        %p166 = pneg %p60
        %p167 = pneg %p57
        %p168 = pneg %p81
        %p169 = pneg %p78
        %p170 = pneg %p107
        %p171 = pneg %p104
        %s172 = sand.u32 %s94, 1
        %s173 = scalar_lea.sflag [#allocation4], %s172
        %s174 = sand.u32 %s94, 1
        %s175 = smul.addr %s174, 8
        %s176 = scalar_lea.vmem [#allocation5], %s175
        %p177 = scmp.lt.s32.totalorder %s18, 1
        %s178 = scalar_select %p177, %s18, 1
        %s179 = smul.addr %s178, 8
        %s180 = scalar_lea.vmem %s0, %s179
        %v181 = vld [vmem:[%s180] sm:$0xff]
        %v182 = vld [vmem:[#allocation2] sm:$0xff]
        %v183 = vld [vmem:[#allocation2 + $0x8] sm:$0xff]
        %v184 = vld [vmem:[#allocation2 + $0x10] sm:$0xff]
        %v185 = vld [vmem:[#allocation2 + $0x18] sm:$0xff]
        %v186 = vld [vmem:[#allocation2 + $0x20] sm:$0xff]
        %v187 = vld [vmem:[#allocation2 + $0x28] sm:$0xff]
        %v188 = vld [vmem:[#allocation2 + $0x30] sm:$0xff]
        %v189 = vld [vmem:[#allocation2 + $0x38] sm:$0xff]
        %v190 = vld [vmem:[#allocation2 + $0x40] sm:$0xff]
        %v191 = vld [vmem:[#allocation2 + $0x48] sm:$0xff]
        %v192 = vld [vmem:[#allocation2 + $0x50] sm:$0xff]
        %v193 = vld [vmem:[#allocation2 + $0x58] sm:$0xff]
        %v194 = vld [vmem:[#allocation2 + $0x60] sm:$0xff]
        %v195 = vld [vmem:[#allocation2 + $0x68] sm:$0xff]
        %v196 = vld [vmem:[#allocation2 + $0x70] sm:$0xff]
        %v197 = vld [vmem:[#allocation2 + $0x78] sm:$0xff]
        %v198 = vld [vmem:[#allocation2 + $0x80] sm:$0xff]
        %v199 = vld [vmem:[#allocation2 + $0x88] sm:$0xff]
        %v200 = vld [vmem:[#allocation2 + $0x90] sm:$0xff]
        %v201 = vld [vmem:[#allocation2 + $0x98] sm:$0xff]
        %v202 = vld [vmem:[#allocation2 + $0xa0] sm:$0xff]
        %v203 = vld [vmem:[#allocation2 + $0xa8] sm:$0xff]
        %v204 = vld [vmem:[#allocation2 + $0xb0] sm:$0xff]
        %v205 = vld [vmem:[#allocation2 + $0xb8] sm:$0xff]
        %v206 = vld [vmem:[#allocation2 + $0xc0] sm:$0xff]
        %v207 = vld [vmem:[#allocation2 + $0xc8] sm:$0xff]
        %v208 = vld [vmem:[#allocation2 + $0xd0] sm:$0xff]
        %v209 = vld [vmem:[#allocation2 + $0xd8] sm:$0xff]
        %v210 = vld [vmem:[#allocation2 + $0xe0] sm:$0xff]
        %v211 = vld [vmem:[#allocation2 + $0xe8] sm:$0xff]
        %v212 = vld [vmem:[#allocation2 + $0xf0] sm:$0xff]
        %v213 = vld [vmem:[#allocation2 + $0xf8] sm:$0xff]
        %v214 = vld [vmem:[#allocation2 + $0x100] sm:$0xff]
        %v215 = vld [vmem:[#allocation2 + $0x108] sm:$0xff]
        %v216 = vld [vmem:[#allocation2 + $0x110] sm:$0xff]
        %v217 = vld [vmem:[#allocation2 + $0x118] sm:$0xff]
        %v218 = vld [vmem:[%s2] sm:$0x7]
        %v220 = vlaneseq
        %v221 = vshrl.u32 %v220, 7
        %v222 = vsub.s32 0, %v221
        %v223 = vrot.slane %v218, %v222
        %v224 = vlaneseq
        %v225 = vshrl.u32 %v224, 7
        %v226 = vsub.s32 1, %v225
        %v227 = vrot.slane %v218, %v226
        %v228 = vlaneseq
        %v229 = vshrl.u32 %v228, 7
        %v230 = vsub.s32 2, %v229
        %v231 = vrot.slane %v218, %v230
        %vm235 = vcmask 785408
        %v237 = vsel %vm235, %v181, 0
        %239 = vmatprep.subr.mxu0 0.0
        %240 = vmatpush1.msra.mxu0 0.0
        %241 = vmatprep.subr.mxu0 0.0
        %242 = vmatpush1.msra.mxu0 0.0
        %243 = vmatprep.subr.mxu0 0.0
        %244 = vmatpush1.msra.mxu0 0.0
        %245 = vmatprep.subr.mxu0 0.0
        %246 = vmatpush1.msra.mxu0 0.0
        %247 = vmatprep.subr.mxu0 %v216
        %248 = vmatpush1.msra.mxu0 %v215
        %249 = vmatprep.subr.mxu0 %v213
        %250 = vmatpush1.msra.mxu0 %v212
        %251 = vmatprep.subr.mxu0 %v210
        %252 = vmatpush1.msra.mxu0 %v209
        %253 = vmatprep.subr.mxu0 %v207
        %254 = vmatpush1.msra.mxu0 %v206
        %255 = vmatprep.subr.mxu0 %v204
        %256 = vmatpush1.msra.mxu0 %v203
        %257 = vmatprep.subr.mxu0 %v201
        %258 = vmatpush1.msra.mxu0 %v200
        %259 = vmatprep.subr.mxu0 %v198
        %260 = vmatpush1.msra.mxu0 %v197
        %261 = vmatprep.subr.mxu0 %v195
        %262 = vmatpush1.msra.mxu0 %v194
        %263 = vmatprep.subr.mxu0 %v192
        %264 = vmatpush1.msra.mxu0 %v191
        %265 = vmatprep.subr.mxu0 %v189
        %266 = vmatpush1.msra.mxu0 %v188
        %267 = vmatprep.subr.mxu0 %v186
        %268 = vmatpush1.msra.mxu0 %v185
        %269 = vmatprep.subr.mxu0 %v183
        %270 = vmatpush1.msra.mxu0 %v182
        %271 = vmatprep.subr.mxu0 0.0
        %272 = vmatpush2.msra.mxu0 0.0
        %273 = vmatprep.subr.mxu0 0.0
        %274 = vmatpush2.msra.mxu0 0.0
        %275 = vmatprep.subr.mxu0 0.0
        %276 = vmatpush2.msra.mxu0 0.0
        %277 = vmatprep.subr.mxu0 0.0
        %278 = vmatpush2.msra.mxu0 0.0
        %279 = vmatprep.subr.mxu0 0.0
        %280 = vmatpush2.msra.mxu0 0.0
        %281 = vmatprep.subr.mxu0 0.0
        %282 = vmatpush2.msra.mxu0 0.0
        %283 = vmatprep.subr.mxu0 0.0
        %284 = vmatpush2.msra.mxu0 0.0
        %285 = vmatprep.subr.mxu0 0.0
        %286 = vmatpush2.msra.mxu0 0.0
        %287 = vmatprep.subr.mxu0 0.0
        %288 = vmatpush2.msra.mxu0 0.0
        %289 = vmatprep.subr.mxu0 0.0
        %290 = vmatpush2.msra.mxu0 0.0
        %291 = vmatprep.subr.mxu0 0.0
        %292 = vmatpush2.msra.mxu0 0.0
        %293 = vmatprep.subr.mxu0 0.0
        %294 = vmatpush2.msra.mxu0 0.0
        %295 = vmatprep.subr.mxu0 0.0
        %296 = vmatpush2.msra.mxu0 0.0
        %297 = vmatprep.subr.mxu0 0.0
        %298 = vmatpush2.msra.mxu0 0.0
        %299 = vmatprep.subr.mxu0 0.0
        %300 = vmatpush2.msra.mxu0 0.0
        %301 = vmatprep.subr.mxu0 0.0
        %302 = vmatpush2.msra.mxu0 0.0
        %303 = vmatprep.mubr.f32.mxu0 0.0
        %304 = vmatmul.mubr.f32.gmra.mxu0 %v237
        %v305 = vpop.f32.mrf.mxu0
        %v306 = vadd.f32 %v223, %v305
        %v307 = vpop.f32.mrf.mxu0
        %v308 = vadd.f32 %v227, %v307
        %309 = vdwg.mxu0
        %310 = vmatprep.subr.mxu0 0.0
        %311 = vmatpush1.msra.mxu0 0.0
        %312 = vmatprep.subr.mxu0 0.0
        %313 = vmatpush1.msra.mxu0 0.0
        %314 = vmatprep.subr.mxu0 0.0
        %315 = vmatpush1.msra.mxu0 0.0
        %316 = vmatprep.subr.mxu0 0.0
        %317 = vmatpush1.msra.mxu0 0.0
        %318 = vmatprep.subr.mxu0 0.0
        %319 = vmatpush1.msra.mxu0 %v217
        %320 = vmatprep.subr.mxu0 0.0
        %321 = vmatpush1.msra.mxu0 %v214
        %322 = vmatprep.subr.mxu0 0.0
        %323 = vmatpush1.msra.mxu0 %v211
        %324 = vmatprep.subr.mxu0 0.0
        %325 = vmatpush1.msra.mxu0 %v208
        %326 = vmatprep.subr.mxu0 0.0
        %327 = vmatpush1.msra.mxu0 %v205
        %328 = vmatprep.subr.mxu0 0.0
        %329 = vmatpush1.msra.mxu0 %v202
        %330 = vmatprep.subr.mxu0 0.0
        %331 = vmatpush1.msra.mxu0 %v199
        %332 = vmatprep.subr.mxu0 0.0
        %333 = vmatpush1.msra.mxu0 %v196
        %334 = vmatprep.subr.mxu0 0.0
        %335 = vmatpush1.msra.mxu0 %v193
        %336 = vmatprep.subr.mxu0 0.0
        %337 = vmatpush1.msra.mxu0 %v190
        %338 = vmatprep.subr.mxu0 0.0
        %339 = vmatpush1.msra.mxu0 %v187
        %340 = vmatprep.subr.mxu0 0.0
        %341 = vmatpush1.msra.mxu0 %v184
        %342 = vmatprep.subr.mxu0 0.0
        %343 = vmatpush2.msra.mxu0 0.0
        %344 = vmatprep.subr.mxu0 0.0
        %345 = vmatpush2.msra.mxu0 0.0
        %346 = vmatprep.subr.mxu0 0.0
        %347 = vmatpush2.msra.mxu0 0.0
        %348 = vmatprep.subr.mxu0 0.0
        %349 = vmatpush2.msra.mxu0 0.0
        %350 = vmatprep.subr.mxu0 0.0
        %351 = vmatpush2.msra.mxu0 0.0
        %352 = vmatprep.subr.mxu0 0.0
        %353 = vmatpush2.msra.mxu0 0.0
        %354 = vmatprep.subr.mxu0 0.0
        %355 = vmatpush2.msra.mxu0 0.0
        %356 = vmatprep.subr.mxu0 0.0
        %357 = vmatpush2.msra.mxu0 0.0
        %358 = vmatprep.subr.mxu0 0.0
        %359 = vmatpush2.msra.mxu0 0.0
        %360 = vmatprep.subr.mxu0 0.0
        %361 = vmatpush2.msra.mxu0 0.0
        %362 = vmatprep.subr.mxu0 0.0
        %363 = vmatpush2.msra.mxu0 0.0
        %364 = vmatprep.subr.mxu0 0.0
        %365 = vmatpush2.msra.mxu0 0.0
        %366 = vmatprep.subr.mxu0 0.0
        %367 = vmatpush2.msra.mxu0 0.0
        %368 = vmatprep.subr.mxu0 0.0
        %369 = vmatpush2.msra.mxu0 0.0
        %370 = vmatprep.subr.mxu0 0.0
        %371 = vmatpush2.msra.mxu0 0.0
        %372 = vmatprep.subr.mxu0 0.0
        %373 = vmatpush2.msra.mxu0 0.0
        %374 = vmatprep.mubr.f32.mxu0 0.0
        %375 = vmatmul.mubr.f32.gmra.mxu0 %v237
        %v376 = vpop.f32.mrf.mxu0
        %v377 = vadd.f32 %v231, %v376
        %v378 = vpop.f32.mrf.mxu0
        %379 = vdwg.mxu0
        %380 = vmatprep.subr.mxu0 0.0
        %381 = vmatpush1.xpose.msra.mxu0 0.0
        %382 = vmatprep.subr.mxu0 0.0
        %383 = vmatpush1.xpose.msra.mxu0 0.0
        %384 = vmatprep.subr.mxu0 0.0
        %385 = vmatpush1.xpose.msra.mxu0 0.0
        %386 = vmatprep.subr.mxu0 0.0
        %387 = vmatpush1.xpose.msra.mxu0 0.0
        %388 = vmatprep.subr.mxu0 0.0
        %389 = vmatpush1.xpose.msra.mxu0 0.0
        %390 = vmatprep.subr.mxu0 0.0
        %391 = vmatpush1.xpose.msra.mxu0 0.0
        %392 = vmatprep.subr.mxu0 0.0
        %393 = vmatpush1.xpose.msra.mxu0 0.0
        %394 = vmatprep.subr.mxu0 0.0
        %395 = vmatpush1.xpose.msra.mxu0 0.0
        %396 = vmatprep.subr.mxu0 0.0
        %397 = vmatpush1.xpose.msra.mxu0 0.0
        %398 = vmatprep.subr.mxu0 0.0
        %399 = vmatpush1.xpose.msra.mxu0 0.0
        %400 = vmatprep.subr.mxu0 0.0
        %401 = vmatpush1.xpose.msra.mxu0 0.0
        %402 = vmatprep.subr.mxu0 0.0
        %403 = vmatpush1.xpose.msra.mxu0 0.0
        %404 = vmatprep.subr.mxu0 0.0
        %405 = vmatpush1.xpose.msra.mxu0 0.0
        %406 = vmatprep.subr.mxu0 0.0
        %407 = vmatpush1.xpose.msra.mxu0 0.0
        %408 = vmatprep.subr.mxu0 0.0
        %409 = vmatpush1.xpose.msra.mxu0 0.0
        %410 = vmatprep.subr.mxu0 0.0
        %411 = vmatpush1.xpose.msra.mxu0 %v308
        %412 = vmatprep.subr.mxu0 0.0
        %413 = vmatpush2.xpose.msra.mxu0 0.0
        %414 = vmatprep.subr.mxu0 0.0
        %415 = vmatpush2.xpose.msra.mxu0 0.0
        %416 = vmatprep.subr.mxu0 0.0
        %417 = vmatpush2.xpose.msra.mxu0 0.0
        %418 = vmatprep.subr.mxu0 0.0
        %419 = vmatpush2.xpose.msra.mxu0 0.0
        %420 = vmatprep.subr.mxu0 0.0
        %421 = vmatpush2.xpose.msra.mxu0 0.0
        %422 = vmatprep.subr.mxu0 0.0
        %423 = vmatpush2.xpose.msra.mxu0 0.0
        %424 = vmatprep.subr.mxu0 0.0
        %425 = vmatpush2.xpose.msra.mxu0 0.0
        %426 = vmatprep.subr.mxu0 0.0
        %427 = vmatpush2.xpose.msra.mxu0 0.0
        %428 = vmatprep.subr.mxu0 0.0
        %429 = vmatpush2.xpose.msra.mxu0 0.0
        %430 = vmatprep.subr.mxu0 0.0
        %431 = vmatpush2.xpose.msra.mxu0 0.0
        %432 = vmatprep.subr.mxu0 0.0
        %433 = vmatpush2.xpose.msra.mxu0 0.0
        %434 = vmatprep.subr.mxu0 0.0
        %435 = vmatpush2.xpose.msra.mxu0 0.0
        %436 = vmatprep.subr.mxu0 0.0
        %437 = vmatpush2.xpose.msra.mxu0 0.0
        %438 = vmatprep.subr.mxu0 0.0
        %439 = vmatpush2.xpose.msra.mxu0 0.0
        %440 = vmatprep.subr.mxu0 0.0
        %441 = vmatpush2.xpose.msra.mxu0 0.0
        %442 = vmatprep.subr.mxu0 0.0
        %443 = vmatpush2.xpose.msra.mxu0 0.0
        %444 = vmatprep.mubr.f32.mxu0 0.0
        %445 = vmatmul.mubr.f32.gmra.mxu0 %v306
        %v446 = vpop.f32.mrf.mxu0
        %v447 = vadd.f32 0.0, %v446
        %v448 = vpop.f32.mrf.mxu0
        %449 = vdwg.mxu0
        %v450 = vlaneseq
        %v451 = vshrl.u32 %v450, 7
        %v452 = vlaneseq
        %v453 = vand.u32 %v452, 127
        %vm454 = vcmp.le.s32.totalorder %v453, %v451
        %v455 = vsel %vm454, %v447, -1e+30
        %vm456 = vcmask 64512
        %v457 = vsel %vm456, %v455, -inf
        %458 = vmax.xlane.f32.xlu0 %v457
        %v459 = vpop.xlane.xlu0 %458
        %v460 = vsub.f32 %v455, %v459
        %v461 = vmul.f32 %v460, 1.442695
        %v462 = vpow.pop %v461
        %v463 = vsel %vm456, %v462, 0.0
        %464 = vadd.xlane.f32.xlu0 %v463
        %v465 = vpop.xlane.xlu0 %464
        %v466 = vrcp.pop %v465
        %v467 = vmul.f32 %v462, %v466
        %v469 = vsel %vm456, %v467, 0
        %471 = vmatprep.subr.mxu0 0.0
        %472 = vmatpush1.msra.mxu0 0.0
        %473 = vmatprep.subr.mxu0 0.0
        %474 = vmatpush1.msra.mxu0 0.0
        %475 = vmatprep.subr.mxu0 0.0
        %476 = vmatpush1.msra.mxu0 0.0
        %477 = vmatprep.subr.mxu0 0.0
        %478 = vmatpush1.msra.mxu0 0.0
        %479 = vmatprep.subr.mxu0 0.0
        %480 = vmatpush1.msra.mxu0 0.0
        %481 = vmatprep.subr.mxu0 0.0
        %482 = vmatpush1.msra.mxu0 0.0
        %483 = vmatprep.subr.mxu0 0.0
        %484 = vmatpush1.msra.mxu0 0.0
        %485 = vmatprep.subr.mxu0 0.0
        %486 = vmatpush1.msra.mxu0 0.0
        %487 = vmatprep.subr.mxu0 0.0
        %488 = vmatpush1.msra.mxu0 0.0
        %489 = vmatprep.subr.mxu0 0.0
        %490 = vmatpush1.msra.mxu0 0.0
        %491 = vmatprep.subr.mxu0 0.0
        %492 = vmatpush1.msra.mxu0 0.0
        %493 = vmatprep.subr.mxu0 0.0
        %494 = vmatpush1.msra.mxu0 0.0
        %495 = vmatprep.subr.mxu0 0.0
        %496 = vmatpush1.msra.mxu0 0.0
        %497 = vmatprep.subr.mxu0 0.0
        %498 = vmatpush1.msra.mxu0 0.0
        %499 = vmatprep.subr.mxu0 0.0
        %500 = vmatpush1.msra.mxu0 0.0
        %501 = vmatprep.subr.mxu0 0.0
        %502 = vmatpush1.msra.mxu0 %v377
        %503 = vmatprep.subr.mxu0 0.0
        %504 = vmatpush2.msra.mxu0 0.0
        %505 = vmatprep.subr.mxu0 0.0
        %506 = vmatpush2.msra.mxu0 0.0
        %507 = vmatprep.subr.mxu0 0.0
        %508 = vmatpush2.msra.mxu0 0.0
        %509 = vmatprep.subr.mxu0 0.0
        %510 = vmatpush2.msra.mxu0 0.0
        %511 = vmatprep.subr.mxu0 0.0
        %512 = vmatpush2.msra.mxu0 0.0
        %513 = vmatprep.subr.mxu0 0.0
        %514 = vmatpush2.msra.mxu0 0.0
        %515 = vmatprep.subr.mxu0 0.0
        %516 = vmatpush2.msra.mxu0 0.0
        %517 = vmatprep.subr.mxu0 0.0
        %518 = vmatpush2.msra.mxu0 0.0
        %519 = vmatprep.subr.mxu0 0.0
        %520 = vmatpush2.msra.mxu0 0.0
        %521 = vmatprep.subr.mxu0 0.0
        %522 = vmatpush2.msra.mxu0 0.0
        %523 = vmatprep.subr.mxu0 0.0
        %524 = vmatpush2.msra.mxu0 0.0
        %525 = vmatprep.subr.mxu0 0.0
        %526 = vmatpush2.msra.mxu0 0.0
        %527 = vmatprep.subr.mxu0 0.0
        %528 = vmatpush2.msra.mxu0 0.0
        %529 = vmatprep.subr.mxu0 0.0
        %530 = vmatpush2.msra.mxu0 0.0
        %531 = vmatprep.subr.mxu0 0.0
        %532 = vmatpush2.msra.mxu0 0.0
        %533 = vmatprep.subr.mxu0 0.0
        %534 = vmatpush2.msra.mxu0 0.0
        %535 = vmatprep.mubr.f32.mxu0 0.0
        %536 = vmatmul.mubr.f32.gmra.mxu0 %v469
        %v537 = vpop.f32.mrf.mxu0
        %v538 = vadd.f32 0.0, %v537
        %v539 = vpop.f32.mrf.mxu0
        %540 = vdwg.mxu0
        %vm541 = vcmask 130048
        %542 = vst.msk [vmem:[%s176] sm:$0xff] %vm541, %v538
        %s543 = sand.u32 %s94, 1
        %s544 = scalar_lea.sflag [#allocation4], %s543
        %s545 = sand.u32 %s94, 1
        %s546 = smul.addr %s545, 8
        %s547 = scalar_lea.vmem [#allocation5], %s546
        // Predicated region
        $region37: #{self_attention_head.1} parent=31 // pred_check
          %p548 = pneg %p104
        $region38: #{self_attention_head.1} parent=31 // pred_check_branch
          %550 = sbr.rel (%p548) target = $region40
        $region39: #{self_attention_head.1} parent=31 // pred_region
          %s552 = ssub.s32 128, 128
          %553 = vsyncadd %s544, %s552
          %s554 = smul.addr %s18, 128
          %s555 = scalar_lea.hbm %s3, %s554
          %s557 = sshll.u32 %s547, 4
          %s558 = int_to_ptr.vmem [resolvable:$true] %s557
          %560 = dma.vmem_to_hbm [thread:$0]  %s558, 128, %s555, %s544
        $region40: #{self_attention_head.1} parent=31 // pred_fallthru
          _
      $region32: #{self_attention_head.1} parent=5 // pred_fallthru
        _
      %p561 = scmp.le.s32.totalorder 2, %s13
      // Predicated region
      $region41: #{self_attention_head.1} parent=5 // pred_check
        %p562 = pneg %p561
      $region42: #{self_attention_head.1} parent=5 // pred_check_branch
        %564 = sbr.rel (%p562) target = $region44
      $region43: #{self_attention_head.1} parent=5 // pred_region
        %s565 = ssub.s32 %s13, 2
        // Predicated region
        $region45: #{self_attention_head.1} parent=43 // pred_check
          %p566 = pneg %p110
        $region46: #{self_attention_head.1} parent=43 // pred_check_branch
          %568 = sbr.rel (%p566) target = $region48
        $region47: #{self_attention_head.1} parent=43 // pred_region
          %s569 = sand.u32 %s95, 1
          %s570 = scalar_lea.sflag [#allocation4], %s569
          %s571 = sand.u32 %s95, 1
          %s572 = smul.addr %s571, 8
          %s573 = scalar_lea.vmem [#allocation5], %s572
          %574 = dma.done %s570, 128
        $region48: #{self_attention_head.1} parent=43 // pred_fallthru
          _
      $region44: #{self_attention_head.1} parent=5 // pred_fallthru
        _
    $region6: #{self_attention_head.1} parent=1 // loop_footer
      %s17 = sadd.s32 1, %s13
    $region7: #{self_attention_head.1} parent=1 // loop_footer_branch
      %12 = sbr.rel target = $region3
    $region8: #{self_attention_head.1} parent=1 // loop_exit
      _
    %575 = vsyncpa [#allocation3], 1
    %s576 = scalar_lea.sflag [#allocation3], 1
    %577 = vsyncpa %s576, 1
    %578 = vsyncpa [#allocation4], 1
    %s579 = scalar_lea.sflag [#allocation4], 1
    %580 = vsyncpa %s579, 1

</llo_original>
